<compile_context>
chip_gen: v5e
topology: v5e:2x2
jax: 0.10.0
libtpu: 0.0.40
codegen_flags: <defaults>
</compile_context>

<pallas_src>
import functools

import jax
import jax.numpy as jnp
from jax.experimental import pallas as pl
from jax.experimental.pallas import tpu as pltpu

NEG_INF = -9e15


def _round_up(x, m):
    return ((x + m - 1) // m) * m


def _elu(v):
    return jnp.where(v > 0, v, jnp.exp(v) - 1.0)


def _softmax_chain_dtype():
    """bf16 elementwise chain on chips with bf16 VPU/EUP (v6e/v7x), f32 otherwise."""
    try:
        kind = jax.devices()[0].device_kind.lower()
    except Exception:
        return jnp.float32
    if "v6" in kind or "v7" in kind:
        return jnp.bfloat16
    return jnp.float32


def _attn_probs_bf16(e1, e2, mask, *, alpha, chain_dtype, exact_recip):
    """Masked-softmax attention probabilities, returned in bf16 (MXU-ready).

    e1: (tq, 1) f32 query-side scores; e2: (1, N) f32 key-side scores;
    mask: (tq, N) bool adjacency mask.  Elementwise chain in `chain_dtype`,
    row-sum accumulation in f32.
    """
    cd = chain_dtype
    e = e1.astype(cd) + e2.astype(cd)                       # (tq, N)
    e = jnp.where(e > 0, e, alpha * e)                      # LeakyReLU
    e = jnp.where(mask, e, NEG_INF)                         # adjacency mask
    m = jnp.max(e, axis=-1, keepdims=True)
    p = jnp.exp(e - m)
    denom = jnp.sum(p.astype(jnp.float32), axis=-1, keepdims=True)
    if exact_recip:
        inv = 1.0 / denom
    else:
        inv = pl.reciprocal(denom, approx=True)
    return (p * inv.astype(cd)).astype(jnp.bfloat16)


def gat_heads_kernel(adj_ref, wh_ref, e1_ref, e2_ref, hid_ref, *,
                     alpha, nheads, nhid, hdim, hdim_pad, chain_dtype):
    """All attention heads for one query-row tile -> ELU(concat(heads))."""
    mask = adj_ref[...].astype(chain_dtype) > 0             # (tq, N)
    parts = []
    for h in range(nheads):                                  # static unroll
        attn = _attn_probs_bf16(
            e1_ref[:, h:h + 1], e2_ref[h:h + 1, :], mask,
            alpha=alpha, chain_dtype=chain_dtype, exact_recip=False)
        agg = jnp.dot(attn, wh_ref[:, h * nhid:(h + 1) * nhid],
                      preferred_element_type=jnp.float32)    # (tq, nhid)
        parts.append(_elu(agg))                              # concat=True -> ELU
    h_cat = jnp.concatenate(parts, axis=-1)                  # (tq, hdim)
    if hdim_pad > hdim:                                      # lane-dense single store
        h_cat = jnp.concatenate(
            [h_cat, jnp.zeros((h_cat.shape[0], hdim_pad - hdim), jnp.float32)],
            axis=-1)
    hid_ref[...] = h_cat.astype(hid_ref.dtype)


def gat_out_kernel(adj_ref, who_ref, e1_ref, e2_ref, out_ref, *,
                   alpha, nclass, chain_dtype):
    """Output attention layer + ELU + log_softmax for one query-row tile."""
    mask = adj_ref[...].astype(chain_dtype) > 0
    attn = _attn_probs_bf16(e1_ref[...], e2_ref[...], mask,
                            alpha=alpha, chain_dtype=chain_dtype, exact_recip=True)
    out = jnp.dot(attn, who_ref[...], preferred_element_type=jnp.float32)  # (tq, CP)
    y = _elu(out)                                            # F.elu(out_att(...))
    # log_softmax over the real nclass columns; the rest is lane padding.
    col = jax.lax.broadcasted_iota(jnp.int32, y.shape, 1)
    valid = col < nclass
    m = jnp.max(jnp.where(valid, y, -jnp.inf), axis=-1, keepdims=True)
    z = y - m
    lse = jnp.log(jnp.sum(jnp.where(valid, jnp.exp(z), 0.0), axis=-1, keepdims=True))
    out_ref[...] = (z - lse).astype(out_ref.dtype)


def gat_forward(x, adj, params, *, alpha):
    n, nfeat = x.shape
    nheads = len(params["heads"])
    nhid = params["heads"][0][0].shape[1]
    nclass = params["out_w"].shape[1]
    hdim = nheads * nhid

    # Query-row tile; pad N so the grid divides evenly.  Padded rows are fully masked
    # (uniform junk attention) and sliced away; padded columns are masked to NEG_INF
    # so they contribute nothing to real rows.
    if n <= 128:
        tq = _round_up(n, 8)
    elif n <= 1024:
        tq = 128
    else:
        tq = 256
    n_pad = _round_up(n, tq)
    num_tiles = n_pad // tq
    hdim_pad = _round_up(max(hdim, 128), 128)    # lane-dense hidden output
    cpad = _round_up(max(nclass, 128), 128)      # lane-dense class output

    chain_dtype = _softmax_chain_dtype()

    x32 = x.astype(jnp.float32)
    # adj is only ever used as a 0/1 mask (matches the reference `adj > 0`).
    adj_p = jnp.zeros((n_pad, n_pad), jnp.int8).at[:n, :n].set(
        (adj > 0).astype(jnp.int8))

    w_all = jnp.concatenate([w for (w, _) in params["heads"]], axis=1)       # (nfeat, hdim)
    a1_all = jnp.stack([a[:nhid] for (_, a) in params["heads"]], axis=0)     # (nheads, nhid)
    a2_all = jnp.stack([a[nhid:] for (_, a) in params["heads"]], axis=0)     # (nheads, nhid)

    # ---- hoisted projection (plain XLA): Wh for all heads + attention-vector dots ----
    wh = x32 @ w_all                                                         # (n, hdim) f32
    wh_heads = wh.reshape(n, nheads, nhid)
    e1 = jnp.einsum("nhd,hd->nh", wh_heads, a1_all)                          # (n, nheads)
    e2 = jnp.einsum("nhd,hd->nh", wh_heads, a2_all).T                        # (nheads, n)

    wh_bf = jnp.zeros((n_pad, hdim), jnp.bfloat16).at[:n].set(wh.astype(jnp.bfloat16))
    e1_p = jnp.zeros((n_pad, nheads), jnp.float32).at[:n].set(e1)
    e2_p = jnp.zeros((nheads, n_pad), jnp.float32).at[:, :n].set(e2)

    cparams = pltpu.CompilerParams(
        dimension_semantics=("parallel",),          # independent row tiles -> megacore
        vmem_limit_bytes=48 * 1024 * 1024,
    )

    # ---------------- call 1: multi-head attention layer -> hidden ----------------
    heads_kernel = functools.partial(
        gat_heads_kernel, alpha=alpha, nheads=nheads, nhid=nhid,
        hdim=hdim, hdim_pad=hdim_pad, chain_dtype=chain_dtype)

    hid_pad = pl.pallas_call(
        heads_kernel,
        out_shape=jax.ShapeDtypeStruct((n_pad, hdim_pad), jnp.float32),
        grid_spec=pltpu.PrefetchScalarGridSpec(
            num_scalar_prefetch=0,
            grid=(num_tiles,),
            in_specs=[
                pl.BlockSpec((tq, n_pad), lambda t: (t, 0)),       # adj row tile (int8)
                pl.BlockSpec((n_pad, hdim), lambda t: (0, 0)),     # Wh (bf16, all heads)
                pl.BlockSpec((tq, nheads), lambda t: (t, 0)),      # query-side scores
                pl.BlockSpec((nheads, n_pad), lambda t: (0, 0)),   # key-side scores
            ],
            out_specs=pl.BlockSpec((tq, hdim_pad), lambda t: (t, 0)),
        ),
        compiler_params=cparams,
    )(adj_p, wh_bf, e1_p, e2_p)

    # ---- hoisted output-layer projection (plain XLA) ----
    hid = hid_pad[:, :hdim]                                                  # (n_pad, hdim)
    who = hid @ params["out_w"]                                              # (n_pad, nclass)
    e1o = (who @ params["out_a"][:nclass]).reshape(n_pad, 1)
    e2o = (who @ params["out_a"][nclass:]).reshape(1, n_pad)
    who_bf = jnp.zeros((n_pad, cpad), jnp.bfloat16).at[:, :nclass].set(
        who.astype(jnp.bfloat16))

    # ---------------- call 2: output attention + ELU + log_softmax ----------------
    out_kernel = functools.partial(
        gat_out_kernel, alpha=alpha, nclass=nclass, chain_dtype=chain_dtype)

    out_pad = pl.pallas_call(
        out_kernel,
        out_shape=jax.ShapeDtypeStruct((n_pad, cpad), jnp.float32),
        grid_spec=pltpu.PrefetchScalarGridSpec(
            num_scalar_prefetch=0,
            grid=(num_tiles,),
            in_specs=[
                pl.BlockSpec((tq, n_pad), lambda t: (t, 0)),       # adj row tile (int8)
                pl.BlockSpec((n_pad, cpad), lambda t: (0, 0)),     # h @ W_out (bf16)
                pl.BlockSpec((tq, 1), lambda t: (t, 0)),           # query-side scores
                pl.BlockSpec((1, n_pad), lambda t: (0, 0)),        # key-side scores
            ],
            out_specs=pl.BlockSpec((tq, cpad), lambda t: (t, 0)),
        ),
        compiler_params=cparams,
    )(adj_p, who_bf, e1o, e2o)

    return out_pad[:n, :nclass]


# ---------------------------- pure-JAX reference -----------------------------
def gat_reference(x, adj, params, *, alpha):
    def layer(h, w, a, concat):
        wh = h @ w
        f_out = w.shape[1]
        e = wh @ a[:f_out][:, None] + (wh @ a[f_out:][:, None]).T
        e = jnp.where(e > 0, e, alpha * e)
        e = jnp.where(adj > 0, e, NEG_INF)
        attn = jax.nn.softmax(e, axis=1)
        out = attn @ wh
        return jax.nn.elu(out) if concat else out

    hidden = jnp.concatenate([layer(x, w, a, True) for (w, a) in params["heads"]],
                             axis=1)
    out = layer(hidden, params["out_w"], params["out_a"], False)
    return jax.nn.log_softmax(jax.nn.elu(out), axis=1)


# --------------------------------- params ------------------------------------
def xavier_uniform(key, shape, gain=1.414):
    fan_in, fan_out = shape[0], shape[-1]
    limit = gain * (6.0 / (fan_in + fan_out)) ** 0.5
    return jax.random.uniform(key, shape, jnp.float32, -limit, limit)


def init_params(key, nfeat, nhid, nclass, nheads):
    keys = jax.random.split(key, 2 * nheads + 2)
    heads = []
    for h in range(nheads):
        w = xavier_uniform(keys[2 * h], (nfeat, nhid))
        a = xavier_uniform(keys[2 * h + 1], (2 * nhid, 1)).reshape(-1)
        heads.append((w, a))
    out_w = xavier_uniform(keys[-2], (nhid * nheads, nclass))
    out_a = xavier_uniform(keys[-1], (2 * nclass, 1)).reshape(-1)
    return {"heads": heads, "out_w": out_w, "out_a": out_a}


if __name__ == "__main__":
    # Small, GAT-consistent shapes: N nodes with nfeat input features.
    N, nfeat, nhid, nclass, nheads = 16, 32, 8, 4, 4
    alpha = 0.2

    key = jax.random.PRNGKey(0)
    kx, kadj, kp = jax.random.split(key, 3)

    x = jax.random.normal(kx, (N, nfeat), jnp.float32)
    adj = jax.random.bernoulli(kadj, 0.3, (N, N)).astype(jnp.float32)
    adj = jnp.maximum(adj, adj.T)                                # symmetric
    adj = jnp.maximum(adj, jnp.eye(N, dtype=jnp.float32))        # self-loops

    params = init_params(kp, nfeat, nhid, nclass, nheads)

    fwd = jax.jit(lambda xx, aa: gat_forward(xx, aa, params, alpha=alpha))
    out = jax.block_until_ready(fwd(x, adj))

    assert out.shape == (N, nclass)
    # rows of log_softmax exponentiate-sum to ~1
    assert jnp.allclose(jnp.sum(jnp.exp(out), axis=1), 1.0, atol=1e-4)
    # matches the pure-JAX reference up to bf16 / approx-reciprocal noise
    ref = gat_reference(x, adj, params, alpha=alpha)
    max_err = float(jnp.max(jnp.abs(out - ref)))
    assert max_err < 0.2, max_err
    print("KERNEL_OK")
</pallas_src>

<mosaic_0001>
module attributes {stable_mosaic.version = 11 : i64} {
  func.func @gat_heads_kernel(%arg0: i32, %arg1: memref<16x16xi8, #tpu.memory_space<vmem>>, %arg2: memref<16x32xbf16, #tpu.memory_space<vmem>>, %arg3: memref<16x4xf32, #tpu.memory_space<vmem>>, %arg4: memref<4x16xf32, #tpu.memory_space<vmem>>, %arg5: memref<16x128xf32, #tpu.memory_space<vmem>>) attributes {dimension_semantics = [#tpu.dimension_semantics<parallel>], iteration_bounds = array<i64: 1>, scalar_prefetch = 0 : i64, scratch_operands = 0 : i64, tpu.core_type = #tpu.core_type<tc>, window_params = [{transform_indices = @transform_0, window_bounds = array<i64: 16, 16>}, {pipeline_mode = #tpu.pipeline_mode<synchronous>, transform_indices = @transform_1, window_bounds = array<i64: 16, 32>}, {transform_indices = @transform_2, window_bounds = array<i64: 16, 4>}, {pipeline_mode = #tpu.pipeline_mode<synchronous>, transform_indices = @transform_3, window_bounds = array<i64: 4, 16>}, {transform_indices = @transform_4, window_bounds = array<i64: 16, 128>}]} {
    %c0 = arith.constant 0 : index
    %c0_0 = arith.constant 0 : index
    %0 = vector.load %arg1[%c0, %c0_0] : memref<16x16xi8, #tpu.memory_space<vmem>>, vector<16x16xi8>
    %1 = arith.sitofp %0 : vector<16x16xi8> to vector<16x16xf32>
    %cst = arith.constant 0.000000e+00 : f32
    %2 = vector.broadcast %cst : f32 to vector<16x16xf32>
    %3 = arith.cmpf ogt, %1, %2 : vector<16x16xf32>
    %c0_1 = arith.constant 0 : index
    %c0_2 = arith.constant 0 : index
    %4 = vector.load %arg3[%c0_1, %c0_2] : memref<16x4xf32, #tpu.memory_space<vmem>>, vector<16x1xf32>
    %c0_3 = arith.constant 0 : index
    %c0_4 = arith.constant 0 : index
    %5 = vector.load %arg4[%c0_3, %c0_4] : memref<4x16xf32, #tpu.memory_space<vmem>>, vector<1x16xf32>
    %6 = vector.broadcast %4 : vector<16x1xf32> to vector<16x16xf32>
    %7 = vector.broadcast %5 : vector<1x16xf32> to vector<16x16xf32>
    %8 = arith.addf %6, %7 : vector<16x16xf32>
    %cst_5 = arith.constant 0.000000e+00 : f32
    %9 = vector.broadcast %cst_5 : f32 to vector<16x16xf32>
    %10 = arith.cmpf ogt, %8, %9 : vector<16x16xf32>
    %cst_6 = arith.constant 2.000000e-01 : f32
    %11 = vector.broadcast %cst_6 : f32 to vector<16x16xf32>
    %12 = arith.mulf %11, %8 : vector<16x16xf32>
    %13 = arith.select %10, %8, %12 : vector<16x16xi1>, vector<16x16xf32>
    %cst_7 = arith.constant -9.000000e+15 : f32
    %14 = vector.broadcast %cst_7 : f32 to vector<16x16xf32>
    %15 = arith.select %3, %13, %14 : vector<16x16xi1>, vector<16x16xf32>
    %cst_8 = arith.constant dense<0xFF800000> : vector<16xf32>
    %16 = vector.multi_reduction <maximumf>, %15, %cst_8 [1] : vector<16x16xf32> to vector<16xf32>
    %17 = vector.shape_cast %16 : vector<16xf32> to vector<16x1xf32>
    %18 = vector.broadcast %17 : vector<16x1xf32> to vector<16x16xf32>
    %19 = arith.subf %15, %18 : vector<16x16xf32>
    %20 = math.exp %19 : vector<16x16xf32>
    %cst_9 = arith.constant dense<0.000000e+00> : vector<16xf32>
    %21 = vector.multi_reduction <add>, %20, %cst_9 [1] : vector<16x16xf32> to vector<16xf32>
    %22 = vector.shape_cast %21 : vector<16xf32> to vector<16x1xf32>
    %23 = tpu.reciprocal %22 {approx = true} : vector<16x1xf32> -> vector<16x1xf32>
    %24 = vector.broadcast %23 : vector<16x1xf32> to vector<16x16xf32>
    %25 = arith.mulf %20, %24 : vector<16x16xf32>
    %26 = arith.truncf %25 : vector<16x16xf32> to vector<16x16xbf16>
    %c0_10 = arith.constant 0 : index
    %c0_11 = arith.constant 0 : index
    %27 = vector.load %arg2[%c0_10, %c0_11] : memref<16x32xbf16, #tpu.memory_space<vmem>>, vector<16x8xbf16>
    %cst_12 = arith.constant dense<0.000000e+00> : vector<16x8xf32>
    %28 = tpu.matmul %26, %27, %cst_12 {dimension_numbers = #tpu.dot_dimension_numbers<[1], [0], [0], [1], [0, 0, 1, 1], [], []>} : vector<16x16xbf16>, vector<16x8xbf16>, vector<16x8xf32> -> vector<16x8xf32>
    %cst_13 = arith.constant 0.000000e+00 : f32
    %29 = vector.broadcast %cst_13 : f32 to vector<16x8xf32>
    %30 = arith.cmpf ogt, %28, %29 : vector<16x8xf32>
    %31 = math.exp %28 : vector<16x8xf32>
    %cst_14 = arith.constant 1.000000e+00 : f32
    %32 = vector.broadcast %cst_14 : f32 to vector<16x8xf32>
    %33 = arith.subf %31, %32 : vector<16x8xf32>
    %34 = arith.select %30, %28, %33 : vector<16x8xi1>, vector<16x8xf32>
    %c0_15 = arith.constant 0 : index
    %c1 = arith.constant 1 : index
    %35 = vector.load %arg3[%c0_15, %c1] : memref<16x4xf32, #tpu.memory_space<vmem>>, vector<16x1xf32>
    %c1_16 = arith.constant 1 : index
    %c0_17 = arith.constant 0 : index
    %36 = vector.load %arg4[%c1_16, %c0_17] : memref<4x16xf32, #tpu.memory_space<vmem>>, vector<1x16xf32>
    %37 = vector.broadcast %35 : vector<16x1xf32> to vector<16x16xf32>
    %38 = vector.broadcast %36 : vector<1x16xf32> to vector<16x16xf32>
    %39 = arith.addf %37, %38 : vector<16x16xf32>
    %cst_18 = arith.constant 0.000000e+00 : f32
    %40 = vector.broadcast %cst_18 : f32 to vector<16x16xf32>
    %41 = arith.cmpf ogt, %39, %40 : vector<16x16xf32>
    %cst_19 = arith.constant 2.000000e-01 : f32
    %42 = vector.broadcast %cst_19 : f32 to vector<16x16xf32>
    %43 = arith.mulf %42, %39 : vector<16x16xf32>
    %44 = arith.select %41, %39, %43 : vector<16x16xi1>, vector<16x16xf32>
    %cst_20 = arith.constant -9.000000e+15 : f32
    %45 = vector.broadcast %cst_20 : f32 to vector<16x16xf32>
    %46 = arith.select %3, %44, %45 : vector<16x16xi1>, vector<16x16xf32>
    %cst_21 = arith.constant dense<0xFF800000> : vector<16xf32>
    %47 = vector.multi_reduction <maximumf>, %46, %cst_21 [1] : vector<16x16xf32> to vector<16xf32>
    %48 = vector.shape_cast %47 : vector<16xf32> to vector<16x1xf32>
    %49 = vector.broadcast %48 : vector<16x1xf32> to vector<16x16xf32>
    %50 = arith.subf %46, %49 : vector<16x16xf32>
    %51 = math.exp %50 : vector<16x16xf32>
    %cst_22 = arith.constant dense<0.000000e+00> : vector<16xf32>
    %52 = vector.multi_reduction <add>, %51, %cst_22 [1] : vector<16x16xf32> to vector<16xf32>
    %53 = vector.shape_cast %52 : vector<16xf32> to vector<16x1xf32>
    %54 = tpu.reciprocal %53 {approx = true} : vector<16x1xf32> -> vector<16x1xf32>
    %55 = vector.broadcast %54 : vector<16x1xf32> to vector<16x16xf32>
    %56 = arith.mulf %51, %55 : vector<16x16xf32>
    %57 = arith.truncf %56 : vector<16x16xf32> to vector<16x16xbf16>
    %c0_23 = arith.constant 0 : index
    %c8 = arith.constant 8 : index
    %58 = vector.load %arg2[%c0_23, %c8] : memref<16x32xbf16, #tpu.memory_space<vmem>>, vector<16x8xbf16>
    %cst_24 = arith.constant dense<0.000000e+00> : vector<16x8xf32>
    %59 = tpu.matmul %57, %58, %cst_24 {dimension_numbers = #tpu.dot_dimension_numbers<[1], [0], [0], [1], [0, 0, 1, 1], [], []>} : vector<16x16xbf16>, vector<16x8xbf16>, vector<16x8xf32> -> vector<16x8xf32>
    %cst_25 = arith.constant 0.000000e+00 : f32
    %60 = vector.broadcast %cst_25 : f32 to vector<16x8xf32>
    %61 = arith.cmpf ogt, %59, %60 : vector<16x8xf32>
    %62 = math.exp %59 : vector<16x8xf32>
    %cst_26 = arith.constant 1.000000e+00 : f32
    %63 = vector.broadcast %cst_26 : f32 to vector<16x8xf32>
    %64 = arith.subf %62, %63 : vector<16x8xf32>
    %65 = arith.select %61, %59, %64 : vector<16x8xi1>, vector<16x8xf32>
    %c0_27 = arith.constant 0 : index
    %c2 = arith.constant 2 : index
    %66 = vector.load %arg3[%c0_27, %c2] : memref<16x4xf32, #tpu.memory_space<vmem>>, vector<16x1xf32>
    %c2_28 = arith.constant 2 : index
    %c0_29 = arith.constant 0 : index
    %67 = vector.load %arg4[%c2_28, %c0_29] : memref<4x16xf32, #tpu.memory_space<vmem>>, vector<1x16xf32>
    %68 = vector.broadcast %66 : vector<16x1xf32> to vector<16x16xf32>
    %69 = vector.broadcast %67 : vector<1x16xf32> to vector<16x16xf32>
    %70 = arith.addf %68, %69 : vector<16x16xf32>
    %cst_30 = arith.constant 0.000000e+00 : f32
    %71 = vector.broadcast %cst_30 : f32 to vector<16x16xf32>
    %72 = arith.cmpf ogt, %70, %71 : vector<16x16xf32>
    %cst_31 = arith.constant 2.000000e-01 : f32
    %73 = vector.broadcast %cst_31 : f32 to vector<16x16xf32>
    %74 = arith.mulf %73, %70 : vector<16x16xf32>
    %75 = arith.select %72, %70, %74 : vector<16x16xi1>, vector<16x16xf32>
    %cst_32 = arith.constant -9.000000e+15 : f32
    %76 = vector.broadcast %cst_32 : f32 to vector<16x16xf32>
    %77 = arith.select %3, %75, %76 : vector<16x16xi1>, vector<16x16xf32>
    %cst_33 = arith.constant dense<0xFF800000> : vector<16xf32>
    %78 = vector.multi_reduction <maximumf>, %77, %cst_33 [1] : vector<16x16xf32> to vector<16xf32>
    %79 = vector.shape_cast %78 : vector<16xf32> to vector<16x1xf32>
    %80 = vector.broadcast %79 : vector<16x1xf32> to vector<16x16xf32>
    %81 = arith.subf %77, %80 : vector<16x16xf32>
    %82 = math.exp %81 : vector<16x16xf32>
    %cst_34 = arith.constant dense<0.000000e+00> : vector<16xf32>
    %83 = vector.multi_reduction <add>, %82, %cst_34 [1] : vector<16x16xf32> to vector<16xf32>
    %84 = vector.shape_cast %83 : vector<16xf32> to vector<16x1xf32>
    %85 = tpu.reciprocal %84 {approx = true} : vector<16x1xf32> -> vector<16x1xf32>
    %86 = vector.broadcast %85 : vector<16x1xf32> to vector<16x16xf32>
    %87 = arith.mulf %82, %86 : vector<16x16xf32>
    %88 = arith.truncf %87 : vector<16x16xf32> to vector<16x16xbf16>
    %c0_35 = arith.constant 0 : index
    %c16 = arith.constant 16 : index
    %89 = vector.load %arg2[%c0_35, %c16] : memref<16x32xbf16, #tpu.memory_space<vmem>>, vector<16x8xbf16>
    %cst_36 = arith.constant dense<0.000000e+00> : vector<16x8xf32>
    %90 = tpu.matmul %88, %89, %cst_36 {dimension_numbers = #tpu.dot_dimension_numbers<[1], [0], [0], [1], [0, 0, 1, 1], [], []>} : vector<16x16xbf16>, vector<16x8xbf16>, vector<16x8xf32> -> vector<16x8xf32>
    %cst_37 = arith.constant 0.000000e+00 : f32
    %91 = vector.broadcast %cst_37 : f32 to vector<16x8xf32>
    %92 = arith.cmpf ogt, %90, %91 : vector<16x8xf32>
    %93 = math.exp %90 : vector<16x8xf32>
    %cst_38 = arith.constant 1.000000e+00 : f32
    %94 = vector.broadcast %cst_38 : f32 to vector<16x8xf32>
    %95 = arith.subf %93, %94 : vector<16x8xf32>
    %96 = arith.select %92, %90, %95 : vector<16x8xi1>, vector<16x8xf32>
    %c0_39 = arith.constant 0 : index
    %c3 = arith.constant 3 : index
    %97 = vector.load %arg3[%c0_39, %c3] : memref<16x4xf32, #tpu.memory_space<vmem>>, vector<16x1xf32>
    %c3_40 = arith.constant 3 : index
    %c0_41 = arith.constant 0 : index
    %98 = vector.load %arg4[%c3_40, %c0_41] : memref<4x16xf32, #tpu.memory_space<vmem>>, vector<1x16xf32>
    %99 = vector.broadcast %97 : vector<16x1xf32> to vector<16x16xf32>
    %100 = vector.broadcast %98 : vector<1x16xf32> to vector<16x16xf32>
    %101 = arith.addf %99, %100 : vector<16x16xf32>
    %cst_42 = arith.constant 0.000000e+00 : f32
    %102 = vector.broadcast %cst_42 : f32 to vector<16x16xf32>
    %103 = arith.cmpf ogt, %101, %102 : vector<16x16xf32>
    %cst_43 = arith.constant 2.000000e-01 : f32
    %104 = vector.broadcast %cst_43 : f32 to vector<16x16xf32>
    %105 = arith.mulf %104, %101 : vector<16x16xf32>
    %106 = arith.select %103, %101, %105 : vector<16x16xi1>, vector<16x16xf32>
    %cst_44 = arith.constant -9.000000e+15 : f32
    %107 = vector.broadcast %cst_44 : f32 to vector<16x16xf32>
    %108 = arith.select %3, %106, %107 : vector<16x16xi1>, vector<16x16xf32>
    %cst_45 = arith.constant dense<0xFF800000> : vector<16xf32>
    %109 = vector.multi_reduction <maximumf>, %108, %cst_45 [1] : vector<16x16xf32> to vector<16xf32>
    %110 = vector.shape_cast %109 : vector<16xf32> to vector<16x1xf32>
    %111 = vector.broadcast %110 : vector<16x1xf32> to vector<16x16xf32>
    %112 = arith.subf %108, %111 : vector<16x16xf32>
    %113 = math.exp %112 : vector<16x16xf32>
    %cst_46 = arith.constant dense<0.000000e+00> : vector<16xf32>
    %114 = vector.multi_reduction <add>, %113, %cst_46 [1] : vector<16x16xf32> to vector<16xf32>
    %115 = vector.shape_cast %114 : vector<16xf32> to vector<16x1xf32>
    %116 = tpu.reciprocal %115 {approx = true} : vector<16x1xf32> -> vector<16x1xf32>
    %117 = vector.broadcast %116 : vector<16x1xf32> to vector<16x16xf32>
    %118 = arith.mulf %113, %117 : vector<16x16xf32>
    %119 = arith.truncf %118 : vector<16x16xf32> to vector<16x16xbf16>
    %c0_47 = arith.constant 0 : index
    %c24 = arith.constant 24 : index
    %120 = vector.load %arg2[%c0_47, %c24] : memref<16x32xbf16, #tpu.memory_space<vmem>>, vector<16x8xbf16>
    %cst_48 = arith.constant dense<0.000000e+00> : vector<16x8xf32>
    %121 = tpu.matmul %119, %120, %cst_48 {dimension_numbers = #tpu.dot_dimension_numbers<[1], [0], [0], [1], [0, 0, 1, 1], [], []>} : vector<16x16xbf16>, vector<16x8xbf16>, vector<16x8xf32> -> vector<16x8xf32>
    %cst_49 = arith.constant 0.000000e+00 : f32
    %122 = vector.broadcast %cst_49 : f32 to vector<16x8xf32>
    %123 = arith.cmpf ogt, %121, %122 : vector<16x8xf32>
    %124 = math.exp %121 : vector<16x8xf32>
    %cst_50 = arith.constant 1.000000e+00 : f32
    %125 = vector.broadcast %cst_50 : f32 to vector<16x8xf32>
    %126 = arith.subf %124, %125 : vector<16x8xf32>
    %127 = arith.select %123, %121, %126 : vector<16x8xi1>, vector<16x8xf32>
    %128 = tpu.concatenate %34, %65, %96, %127 in 1 : vector<16x8xf32>, vector<16x8xf32>, vector<16x8xf32>, vector<16x8xf32> -> vector<16x32xf32>
    %cst_51 = arith.constant 0.000000e+00 : f32
    %129 = vector.broadcast %cst_51 : f32 to vector<16x96xf32>
    %130 = tpu.concatenate %128, %129 in 1 : vector<16x32xf32>, vector<16x96xf32> -> vector<16x128xf32>
    %c0_52 = arith.constant 0 : index
    %c0_53 = arith.constant 0 : index
    %131 = vector.load %arg5[%c0_52, %c0_53] : memref<16x128xf32, #tpu.memory_space<vmem>>, vector<16x128xf32>
    tpu.vector_store %arg5[%c0_52, %c0_53], %130 {strides = array<i32>} : memref<16x128xf32, #tpu.memory_space<vmem>>, vector<16x128xf32>,
    return
  }
  func.func @transform_0(%arg0: i32) -> (i32, i32) {
    %c0_i32 = arith.constant 0 : i32
    %c0_i32_0 = arith.constant 0 : i32
    return %arg0, %c0_i32 : i32, i32
  }
  func.func @transform_1(%arg0: i32) -> (i32, i32) {
    %c0_i32 = arith.constant 0 : i32
    %c0_i32_0 = arith.constant 0 : i32
    %c0_i32_1 = arith.constant 0 : i32
    return %c0_i32, %c0_i32_0 : i32, i32
  }
  func.func @transform_2(%arg0: i32) -> (i32, i32) {
    %c0_i32 = arith.constant 0 : i32
    %c0_i32_0 = arith.constant 0 : i32
    return %arg0, %c0_i32 : i32, i32
  }
  func.func @transform_3(%arg0: i32) -> (i32, i32) {
    %c0_i32 = arith.constant 0 : i32
    %c0_i32_0 = arith.constant 0 : i32
    %c0_i32_1 = arith.constant 0 : i32
    return %c0_i32, %c0_i32_0 : i32, i32
  }
  func.func @transform_4(%arg0: i32) -> (i32, i32) {
    %c0_i32 = arith.constant 0 : i32
    %c0_i32_0 = arith.constant 0 : i32
    return %arg0, %c0_i32 : i32, i32
  }
}

module attributes {stable_mosaic.version = 11 : i64} {
  func.func @gat_out_kernel(%arg0: i32, %arg1: memref<16x16xi8, #tpu.memory_space<vmem>>, %arg2: memref<16x128xbf16, #tpu.memory_space<vmem>>, %arg3: memref<16x1xf32, #tpu.memory_space<vmem>>, %arg4: memref<1x16xf32, #tpu.memory_space<vmem>>, %arg5: memref<16x128xf32, #tpu.memory_space<vmem>>) attributes {dimension_semantics = [#tpu.dimension_semantics<parallel>], iteration_bounds = array<i64: 1>, scalar_prefetch = 0 : i64, scratch_operands = 0 : i64, tpu.core_type = #tpu.core_type<tc>, window_params = [{transform_indices = @transform_0, window_bounds = array<i64: 16, 16>}, {pipeline_mode = #tpu.pipeline_mode<synchronous>, transform_indices = @transform_1, window_bounds = array<i64: 16, 128>}, {transform_indices = @transform_2, window_bounds = array<i64: 16, 1>}, {pipeline_mode = #tpu.pipeline_mode<synchronous>, transform_indices = @transform_3, window_bounds = array<i64: 1, 16>}, {transform_indices = @transform_4, window_bounds = array<i64: 16, 128>}]} {
    %c0 = arith.constant 0 : index
    %c0_0 = arith.constant 0 : index
    %0 = vector.load %arg1[%c0, %c0_0] : memref<16x16xi8, #tpu.memory_space<vmem>>, vector<16x16xi8>
    %1 = arith.sitofp %0 : vector<16x16xi8> to vector<16x16xf32>
    %cst = arith.constant 0.000000e+00 : f32
    %2 = vector.broadcast %cst : f32 to vector<16x16xf32>
    %3 = arith.cmpf ogt, %1, %2 : vector<16x16xf32>
    %c0_1 = arith.constant 0 : index
    %c0_2 = arith.constant 0 : index
    %4 = vector.load %arg3[%c0_1, %c0_2] : memref<16x1xf32, #tpu.memory_space<vmem>>, vector<16x1xf32>
    %c0_3 = arith.constant 0 : index
    %c0_4 = arith.constant 0 : index
    %5 = vector.load %arg4[%c0_3, %c0_4] : memref<1x16xf32, #tpu.memory_space<vmem>>, vector<1x16xf32>
    %6 = vector.broadcast %4 : vector<16x1xf32> to vector<16x16xf32>
    %7 = vector.broadcast %5 : vector<1x16xf32> to vector<16x16xf32>
    %8 = arith.addf %6, %7 : vector<16x16xf32>
    %cst_5 = arith.constant 0.000000e+00 : f32
    %9 = vector.broadcast %cst_5 : f32 to vector<16x16xf32>
    %10 = arith.cmpf ogt, %8, %9 : vector<16x16xf32>
    %cst_6 = arith.constant 2.000000e-01 : f32
    %11 = vector.broadcast %cst_6 : f32 to vector<16x16xf32>
    %12 = arith.mulf %11, %8 : vector<16x16xf32>
    %13 = arith.select %10, %8, %12 : vector<16x16xi1>, vector<16x16xf32>
    %cst_7 = arith.constant -9.000000e+15 : f32
    %14 = vector.broadcast %cst_7 : f32 to vector<16x16xf32>
    %15 = arith.select %3, %13, %14 : vector<16x16xi1>, vector<16x16xf32>
    %cst_8 = arith.constant dense<0xFF800000> : vector<16xf32>
    %16 = vector.multi_reduction <maximumf>, %15, %cst_8 [1] : vector<16x16xf32> to vector<16xf32>
    %17 = vector.shape_cast %16 : vector<16xf32> to vector<16x1xf32>
    %18 = vector.broadcast %17 : vector<16x1xf32> to vector<16x16xf32>
    %19 = arith.subf %15, %18 : vector<16x16xf32>
    %20 = math.exp %19 : vector<16x16xf32>
    %cst_9 = arith.constant dense<0.000000e+00> : vector<16xf32>
    %21 = vector.multi_reduction <add>, %20, %cst_9 [1] : vector<16x16xf32> to vector<16xf32>
    %22 = vector.shape_cast %21 : vector<16xf32> to vector<16x1xf32>
    %cst_10 = arith.constant 1.000000e+00 : f32
    %23 = vector.broadcast %cst_10 : f32 to vector<16x1xf32>
    %24 = arith.divf %23, %22 : vector<16x1xf32>
    %25 = vector.broadcast %24 : vector<16x1xf32> to vector<16x16xf32>
    %26 = arith.mulf %20, %25 : vector<16x16xf32>
    %27 = arith.truncf %26 : vector<16x16xf32> to vector<16x16xbf16>
    %c0_11 = arith.constant 0 : index
    %c0_12 = arith.constant 0 : index
    %28 = vector.load %arg2[%c0_11, %c0_12] : memref<16x128xbf16, #tpu.memory_space<vmem>>, vector<16x128xbf16>
    %cst_13 = arith.constant dense<0.000000e+00> : vector<16x128xf32>
    %29 = tpu.matmul %27, %28, %cst_13 {dimension_numbers = #tpu.dot_dimension_numbers<[1], [0], [0], [1], [0, 0, 1, 1], [], []>} : vector<16x16xbf16>, vector<16x128xbf16>, vector<16x128xf32> -> vector<16x128xf32>
    %cst_14 = arith.constant 0.000000e+00 : f32
    %30 = vector.broadcast %cst_14 : f32 to vector<16x128xf32>
    %31 = arith.cmpf ogt, %29, %30 : vector<16x128xf32>
    %32 = math.exp %29 : vector<16x128xf32>
    %cst_15 = arith.constant 1.000000e+00 : f32
    %33 = vector.broadcast %cst_15 : f32 to vector<16x128xf32>
    %34 = arith.subf %32, %33 : vector<16x128xf32>
    %35 = arith.select %31, %29, %34 : vector<16x128xi1>, vector<16x128xf32>
    %36 = tpu.iota {dimensions = array<i32: 1>} : vector<16x128xi32>
    %c4_i32 = arith.constant 4 : i32
    %37 = vector.broadcast %c4_i32 : i32 to vector<16x128xi32>
    %38 = arith.cmpi slt, %36, %37 : vector<16x128xi32>
    %cst_16 = arith.constant 0xFF800000 : f32
    %39 = vector.broadcast %cst_16 : f32 to vector<16x128xf32>
    %40 = arith.select %38, %35, %39 : vector<16x128xi1>, vector<16x128xf32>
    %cst_17 = arith.constant dense<0xFF800000> : vector<16xf32>
    %41 = vector.multi_reduction <maximumf>, %40, %cst_17 [1] : vector<16x128xf32> to vector<16xf32>
    %42 = vector.shape_cast %41 : vector<16xf32> to vector<16x1xf32>
    %43 = vector.broadcast %42 : vector<16x1xf32> to vector<16x128xf32>
    %44 = arith.subf %35, %43 : vector<16x128xf32>
    %45 = math.exp %44 : vector<16x128xf32>
    %cst_18 = arith.constant 0.000000e+00 : f32
    %46 = vector.broadcast %cst_18 : f32 to vector<16x128xf32>
    %47 = arith.select %38, %45, %46 : vector<16x128xi1>, vector<16x128xf32>
    %cst_19 = arith.constant dense<0.000000e+00> : vector<16xf32>
    %48 = vector.multi_reduction <add>, %47, %cst_19 [1] : vector<16x128xf32> to vector<16xf32>
    %49 = vector.shape_cast %48 : vector<16xf32> to vector<16x1xf32>
    %50 = math.log %49 : vector<16x1xf32>
    %51 = vector.broadcast %50 : vector<16x1xf32> to vector<16x128xf32>
    %52 = arith.subf %44, %51 : vector<16x128xf32>
    %c0_20 = arith.constant 0 : index
    %c0_21 = arith.constant 0 : index
    %53 = vector.load %arg5[%c0_20, %c0_21] : memref<16x128xf32, #tpu.memory_space<vmem>>, vector<16x128xf32>
    tpu.vector_store %arg5[%c0_20, %c0_21], %52 {strides = array<i32>} : memref<16x128xf32, #tpu.memory_space<vmem>>, vector<16x128xf32>,
    return
  }
  func.func @transform_0(%arg0: i32) -> (i32, i32) {
    %c0_i32 = arith.constant 0 : i32
    %c0_i32_0 = arith.constant 0 : i32
    return %arg0, %c0_i32 : i32, i32
  }
  func.func @transform_1(%arg0: i32) -> (i32, i32) {
    %c0_i32 = arith.constant 0 : i32
    %c0_i32_0 = arith.constant 0 : i32
    %c0_i32_1 = arith.constant 0 : i32
    return %c0_i32, %c0_i32_0 : i32, i32
  }
  func.func @transform_2(%arg0: i32) -> (i32, i32) {
    %c0_i32 = arith.constant 0 : i32
    %c0_i32_0 = arith.constant 0 : i32
    return %arg0, %c0_i32 : i32, i32
  }
  func.func @transform_3(%arg0: i32) -> (i32, i32) {
    %c0_i32 = arith.constant 0 : i32
    %c0_i32_0 = arith.constant 0 : i32
    %c0_i32_1 = arith.constant 0 : i32
    return %c0_i32, %c0_i32_0 : i32, i32
  }
  func.func @transform_4(%arg0: i32) -> (i32, i32) {
    %c0_i32 = arith.constant 0 : i32
    %c0_i32_0 = arith.constant 0 : i32
    return %arg0, %c0_i32 : i32, i32
  }
}

</mosaic_0001>

<llo_original>
// kernel: _lambda_.3
$region0: #{_lambda_.3}
  #allocation0 [shape = 'u32[]', space=smem, size = 0x4, offset = 0x4, fixed_abs, tag = 'smem constant byte address 0x4 - core index']
  #allocation1 [shape = 'u32[72,128]{1,0:T(1,128)}', space=vmem, size = 0x9000, scoped, tag = 'internal scratch']
  %s0 = inlined_call_operand.vmem [shape: s8[16,16], index: 0, kind: input, shape index: {}]
  %s1 = inlined_call_operand.vmem [shape: bf16[16,128], index: 1, kind: input, shape index: {}]
  %s2 = inlined_call_operand.vmem [shape: f32[16,1], index: 2, kind: input, shape index: {}]
  %s3 = inlined_call_operand.vmem [shape: f32[1,16], index: 3, kind: input, shape index: {}]
  %s4 = inlined_call_operand.vmem [shape: f32[16,128], index: 4, kind: output, shape index: {}]
  %s5 = sld [smem:[#allocation0]]
  $region26: #{_lambda_.3} parent=0
    _
  %s7 = ssub.s32 1, %s5
  %s8 = scalar_select 0, %s7, %s5
  // Predicated region
  $region2: #{_lambda_.3} parent=0 // pred_check
    _
  $region3: #{_lambda_.3} parent=0 // pred_check_branch
    %10 = sbr.rel (0) target = $region5
  $region4: #{_lambda_.3} parent=0 // pred_region
    _
  $region5: #{_lambda_.3} parent=0 // pred_fallthru
    _
  // Predicated region
  $region6: #{_lambda_.3} parent=0 // pred_check
    _
  $region7: #{_lambda_.3} parent=0 // pred_check_branch
    %12 = sbr.rel (0) target = $region9
  $region8: #{_lambda_.3} parent=0 // pred_region
    _
  $region9: #{_lambda_.3} parent=0 // pred_fallthru
    _
  // Predicated region
  $region10: #{_lambda_.3} parent=0 // pred_check
    _
  $region11: #{_lambda_.3} parent=0 // pred_check_branch
    %14 = sbr.rel (0) target = $region13
  $region12: #{_lambda_.3} parent=0 // pred_region
    _
  $region13: #{_lambda_.3} parent=0 // pred_fallthru
    _
  // Predicated region
  $region14: #{_lambda_.3} parent=0 // pred_check
    _
  $region15: #{_lambda_.3} parent=0 // pred_check_branch
    %16 = sbr.rel (0) target = $region17
  $region16: #{_lambda_.3} parent=0 // pred_region
    _
  $region17: #{_lambda_.3} parent=0 // pred_fallthru
    _
  %v18 = vld [vmem:[%s0] sm:$0x3]
  %v19 = vld [vmem:[%s0 + $0x2] sm:$0x3]
  %v20 = vunpack.c.0.s8 %v18
  %v21 = vunpack.c.0.s8 %v19
  %v22 = vcvt.s32.f32 %v20
  %v23 = vcvt.s32.f32 %v21
  %vm24 = vcmp.gt.f32.partialorder %v22, 0.0
  %vm25 = vcmp.gt.f32.partialorder %v23, 0.0
  %v26 = vld [vmem:[%s2] sm:$0xff]
  %v27 = vld [vmem:[%s2 + $0x8] sm:$0xff]
  %v28 = vld [vmem:[%s3] sm:$0x1]
  %30 = vset.pattern.permute.xlu0 0
  %31 = vperm.xlu0 %30, %v26
  %v32 = vpop.permute.xlu0 %31
  %35 = vset.pattern.permute.xlu0 0
  %36 = vperm.xlu0 %35, %v27
  %v37 = vpop.permute.xlu0 %36
  %v40 = vperm.slane %v28, 0
  %v42 = vadd.f32 %v32, %v40
  %v43 = vadd.f32 %v37, %v40
  %vm44 = vcmp.gt.f32.partialorder %v42, 0.0
  %vm45 = vcmp.gt.f32.partialorder %v43, 0.0
  %v46 = vmul.f32 %v42, 0.2
  %v47 = vmul.f32 %v43, 0.2
  %v48 = vsel %vm44, %v42, %v46
  %v49 = vsel %vm45, %v43, %v47
  %v50 = vsel %vm24, %v48, -9e+15
  %v51 = vsel %vm25, %v49, -9e+15
  %vm52 = vcmask 130048
  %v53 = vsel %vm52, %v50, -inf
  %54 = vmax.xlane.f32.xlu0 %v53
  %v55 = vpop.xlane.xlu0 %54
  %v56 = vsel %vm52, %v51, -inf
  %57 = vmax.xlane.f32.xlu0 %v56
  %v58 = vpop.xlane.xlu0 %57
  %v59 = vsub.f32 %v50, %v55
  %v60 = vsub.f32 %v51, %v58
  %v61 = vmul.f32 %v59, 1.442695
  %v62 = vpow.pop %v61
  %v63 = vmul.f32 %v60, 1.442695
  %v64 = vpow.pop %v63
  %v65 = vsel %vm52, %v62, 0.0
  %66 = vadd.xlane.f32.xlu0 %v65
  %v67 = vpop.xlane.xlu0 %66
  %v68 = vsel %vm52, %v64, 0.0
  %69 = vadd.xlane.f32.xlu0 %v68
  %v70 = vpop.xlane.xlu0 %69
  %v71 = vrcp.pop %v67
  %v72 = vmul.f32 %v67, %v71
  %v73 = vsub.f32 1.0, %v72
  %v74 = vmul.f32 %v71, %v73
  %v75 = vadd.f32 %v71, %v74
  %vm76 = vweird.f32 %v67
  %vm77 = vweird.f32 %v71
  %vm78 = vmor %vm76, %vm77
  %v79 = vsel %vm78, %v71, %v75
  %v80 = vand.u32 2147483647, %v67
  %vm81 = vcmp.eq.f32.partialorder %v80, 8.507059e+37
  %v82 = vand.u32 %v67, 2147483648
  %v83 = vor.u32 1.1754944e-38, %v82
  %v84 = vsel %vm81, %v83, %v79
  %v85 = vmul.f32 1.0, %v84
  %v86 = vrcp.pop %v70
  %v87 = vmul.f32 %v70, %v86
  %v88 = vsub.f32 1.0, %v87
  %v89 = vmul.f32 %v86, %v88
  %v90 = vadd.f32 %v86, %v89
  %vm91 = vweird.f32 %v70
  %vm92 = vweird.f32 %v86
  %vm93 = vmor %vm91, %vm92
  %v94 = vsel %vm93, %v86, %v90
  %v95 = vand.u32 2147483647, %v70
  %vm96 = vcmp.eq.f32.partialorder %v95, 8.507059e+37
  %v97 = vand.u32 %v70, 2147483648
  %v98 = vor.u32 1.1754944e-38, %v97
  %v99 = vsel %vm96, %v98, %v94
  %v100 = vmul.f32 1.0, %v99
  %v101 = vmul.f32 %v62, %v85
  %v102 = vmul.f32 %v64, %v100
  %v103 = vpack.c.bf16 %v102, %v101
  %v104 = vld [vmem:[%s1] sm:$0xf]
  %v105 = vld [vmem:[%s1 + $0x4] sm:$0xf]
  %v108 = vunpack.c.l.b16 %v104
  %v109 = vunpack.c.l.b16 %v105
  %v110 = vpack.c.b16 %v109, %v108
  %v113 = vsel %vm52, %v103, 0
  %115 = vmatpush.bf16.msra.mxu0 0
  %116 = vmatpush.bf16.msra.mxu0 0
  %117 = vmatpush.bf16.msra.mxu0 0
  %118 = vmatpush.bf16.msra.mxu0 0
  %119 = vmatpush.bf16.msra.mxu0 0
  %120 = vmatpush.bf16.msra.mxu0 0
  %121 = vmatpush.bf16.msra.mxu0 0
  %122 = vmatpush.bf16.msra.mxu0 %v110
  %123 = vmatmul.bf16.gmra.mxu0 %v113
  %v124 = vpop.f32.mrf.mxu0
  %v125 = vadd.f32 0.0, %v124
  %v126 = vpop.f32.mrf.mxu0
  %v127 = vadd.f32 0.0, %v126
  %128 = vdwg.mxu0
  %vm129 = vcmp.gt.f32.partialorder %v125, 0.0
  %vm130 = vcmp.gt.f32.partialorder %v127, 0.0
  %v131 = vmul.f32 %v125, 1.442695
  %v132 = vpow.pop %v131
  %v133 = vmul.f32 %v127, 1.442695
  %v134 = vpow.pop %v133
  %v135 = vsub.f32 %v132, 1.0
  %v136 = vsub.f32 %v134, 1.0
  %v137 = vsel %vm129, %v125, %v135
  %v138 = vsel %vm130, %v127, %v136
  %v139 = vlaneseq
  %v140 = vand.u32 %v139, 127
  %vm141 = vcmp.lt.s32.totalorder %v140, 4
  %v142 = vsel %vm141, %v137, -inf
  %v143 = vsel %vm141, %v138, -inf
  %144 = vmax.xlane.f32.xlu0 %v142
  %v145 = vpop.xlane.xlu0 %144
  %146 = vmax.xlane.f32.xlu0 %v143
  %v147 = vpop.xlane.xlu0 %146
  %v148 = vsub.f32 %v137, %v145
  %v149 = vsub.f32 %v138, %v147
  %v150 = vmul.f32 %v148, 1.442695
  %v151 = vpow.pop %v150
  %v152 = vmul.f32 %v149, 1.442695
  %v153 = vpow.pop %v152
  %v154 = vsel %vm141, %v151, 0.0
  %v155 = vsel %vm141, %v153, 0.0
  %156 = vadd.xlane.f32.xlu0 %v154
  %v157 = vpop.xlane.xlu0 %156
  %158 = vadd.xlane.f32.xlu0 %v155
  %v159 = vpop.xlane.xlu0 %158
  %v160 = vlog2.pop %v157
  %v161 = vmul.f32 %v160, 0.6931472
  %v162 = vlog2.pop %v159
  %v163 = vmul.f32 %v162, 0.6931472
  %v164 = vsub.f32 %v148, %v161
  %v165 = vsub.f32 %v149, %v163
  %166 = vst [vmem:[%s4] sm:$0xff] %v164
  %167 = vst [vmem:[%s4 + $0x8] sm:$0xff] %v165
  // Predicated region
  $region18: #{_lambda_.3} parent=0 // pred_check
    _
  $region19: #{_lambda_.3} parent=0 // pred_check_branch
    %169 = sbr.rel (0) target = $region21
  $region20: #{_lambda_.3} parent=0 // pred_region
    _
  $region21: #{_lambda_.3} parent=0 // pred_fallthru
    _
  // Predicated region
  $region22: #{_lambda_.3} parent=0 // pred_check
    _
  $region23: #{_lambda_.3} parent=0 // pred_check_branch
    %171 = sbr.rel (0) target = $region25
  $region24: #{_lambda_.3} parent=0 // pred_region
    _
  $region25: #{_lambda_.3} parent=0 // pred_fallthru
    _

// kernel: _lambda_.2
$region0: #{_lambda_.2}
  #allocation0 [shape = 'u32[]', space=smem, size = 0x4, offset = 0x4, fixed_abs, tag = 'smem constant byte address 0x4 - core index']
  #allocation1 [shape = 'u32[72,128]{1,0:T(1,128)}', space=vmem, size = 0x9000, scoped, tag = 'internal scratch']
  %s0 = inlined_call_operand.vmem [shape: s8[16,16], index: 0, kind: input, shape index: {}]
  %s1 = inlined_call_operand.vmem [shape: bf16[16,32], index: 1, kind: input, shape index: {}]
  %s2 = inlined_call_operand.vmem [shape: f32[16,4], index: 2, kind: input, shape index: {}]
  %s3 = inlined_call_operand.vmem [shape: f32[4,16], index: 3, kind: input, shape index: {}]
  %s4 = inlined_call_operand.vmem [shape: f32[16,128], index: 4, kind: output, shape index: {}]
  %s5 = sld [smem:[#allocation0]]
  $region26: #{_lambda_.2} parent=0
    _
  %s7 = ssub.s32 1, %s5
  %s8 = scalar_select 0, %s7, %s5
  // Predicated region
  $region2: #{_lambda_.2} parent=0 // pred_check
    _
  $region3: #{_lambda_.2} parent=0 // pred_check_branch
    %10 = sbr.rel (0) target = $region5
  $region4: #{_lambda_.2} parent=0 // pred_region
    _
  $region5: #{_lambda_.2} parent=0 // pred_fallthru
    _
  // Predicated region
  $region6: #{_lambda_.2} parent=0 // pred_check
    _
  $region7: #{_lambda_.2} parent=0 // pred_check_branch
    %12 = sbr.rel (0) target = $region9
  $region8: #{_lambda_.2} parent=0 // pred_region
    _
  $region9: #{_lambda_.2} parent=0 // pred_fallthru
    _
  // Predicated region
  $region10: #{_lambda_.2} parent=0 // pred_check
    _
  $region11: #{_lambda_.2} parent=0 // pred_check_branch
    %14 = sbr.rel (0) target = $region13
  $region12: #{_lambda_.2} parent=0 // pred_region
    _
  $region13: #{_lambda_.2} parent=0 // pred_fallthru
    _
  // Predicated region
  $region14: #{_lambda_.2} parent=0 // pred_check
    _
  $region15: #{_lambda_.2} parent=0 // pred_check_branch
    %16 = sbr.rel (0) target = $region17
  $region16: #{_lambda_.2} parent=0 // pred_region
    _
  $region17: #{_lambda_.2} parent=0 // pred_fallthru
    _
  %v18 = vld [vmem:[%s0] sm:$0x3]
  %v19 = vld [vmem:[%s0 + $0x2] sm:$0x3]
  %v20 = vunpack.c.0.s8 %v18
  %v21 = vunpack.c.0.s8 %v19
  %v22 = vcvt.s32.f32 %v20
  %v23 = vcvt.s32.f32 %v21
  %vm24 = vcmp.gt.f32.partialorder %v22, 0.0
  %vm25 = vcmp.gt.f32.partialorder %v23, 0.0
  %v26 = vld [vmem:[%s2] sm:$0xff]
  %v27 = vld [vmem:[%s2 + $0x8] sm:$0xff]
  %v28 = vld [vmem:[%s3] sm:$0x1]
  %30 = vset.pattern.permute.xlu0 0
  %31 = vperm.xlu0 %30, %v26
  %v32 = vpop.permute.xlu0 %31
  %35 = vset.pattern.permute.xlu0 0
  %36 = vperm.xlu0 %35, %v27
  %v37 = vpop.permute.xlu0 %36
  %v39 = vperm.slane %v28, 0
  %v40 = vadd.f32 %v32, %v39
  %v41 = vadd.f32 %v37, %v39
  %vm42 = vcmp.gt.f32.partialorder %v40, 0.0
  %vm43 = vcmp.gt.f32.partialorder %v41, 0.0
  %v44 = vmul.f32 %v40, 0.2
  %v45 = vmul.f32 %v41, 0.2
  %v46 = vsel %vm42, %v40, %v44
  %v47 = vsel %vm43, %v41, %v45
  %v48 = vsel %vm24, %v46, -9e+15
  %v49 = vsel %vm25, %v47, -9e+15
  %vm50 = vcmask 130048
  %v51 = vsel %vm50, %v48, -inf
  %52 = vmax.xlane.f32.xlu0 %v51
  %v53 = vpop.xlane.xlu0 %52
  %v54 = vsel %vm50, %v49, -inf
  %55 = vmax.xlane.f32.xlu0 %v54
  %v56 = vpop.xlane.xlu0 %55
  %v57 = vsub.f32 %v48, %v53
  %v58 = vsub.f32 %v49, %v56
  %v59 = vmul.f32 %v57, 1.442695
  %v60 = vpow.pop %v59
  %v61 = vmul.f32 %v58, 1.442695
  %v62 = vpow.pop %v61
  %v63 = vsel %vm50, %v60, 0.0
  %64 = vadd.xlane.f32.xlu0 %v63
  %v65 = vpop.xlane.xlu0 %64
  %v66 = vsel %vm50, %v62, 0.0
  %67 = vadd.xlane.f32.xlu0 %v66
  %v68 = vpop.xlane.xlu0 %67
  %v69 = vrcp.pop %v65
  %v70 = vrcp.pop %v68
  %v71 = vmul.f32 %v60, %v69
  %v72 = vmul.f32 %v62, %v70
  %v73 = vpack.c.bf16 %v72, %v71
  %v74 = vld [vmem:[%s1] sm:$0xf]
  %v75 = vld [vmem:[%s1 + $0x4] sm:$0xf]
  %v78 = vunpack.c.l.b16 %v74
  %v79 = vunpack.c.l.b16 %v75
  %v80 = vpack.c.b16 %v79, %v78
  %v83 = vsel %vm50, %v73, 0
  %85 = vmatpush.bf16.msra.mxu0 0
  %86 = vmatpush.bf16.msra.mxu0 0
  %87 = vmatpush.bf16.msra.mxu0 0
  %88 = vmatpush.bf16.msra.mxu0 0
  %89 = vmatpush.bf16.msra.mxu0 0
  %90 = vmatpush.bf16.msra.mxu0 0
  %91 = vmatpush.bf16.msra.mxu0 0
  %92 = vmatpush.bf16.msra.mxu0 %v80
  %93 = vmatmul.bf16.gmra.mxu0 %v83
  %v94 = vpop.f32.mrf.mxu0
  %v95 = vadd.f32 0.0, %v94
  %v96 = vpop.f32.mrf.mxu0
  %v97 = vadd.f32 0.0, %v96
  %98 = vdwg.mxu0
  %vm99 = vcmp.gt.f32.partialorder %v95, 0.0
  %vm100 = vcmp.gt.f32.partialorder %v97, 0.0
  %v101 = vmul.f32 %v95, 1.442695
  %v102 = vpow.pop %v101
  %v103 = vmul.f32 %v97, 1.442695
  %v104 = vpow.pop %v103
  %v105 = vsub.f32 %v102, 1.0
  %v106 = vsub.f32 %v104, 1.0
  %v107 = vsel %vm99, %v95, %v105
  %v108 = vsel %vm100, %v97, %v106
  %v109 = vld [vmem:[%s3 + $0x1] sm:$0x1]
  %110 = vset.pattern.permute.xlu0 1
  %111 = vperm.xlu0 %110, %v26
  %v112 = vpop.permute.xlu0 %111
  %114 = vset.pattern.permute.xlu0 1
  %115 = vperm.xlu0 %114, %v27
  %v116 = vpop.permute.xlu0 %115
  %v118 = vperm.slane %v109, 0
  %v119 = vadd.f32 %v112, %v118
  %v120 = vadd.f32 %v116, %v118
  %vm121 = vcmp.gt.f32.partialorder %v119, 0.0
  %vm122 = vcmp.gt.f32.partialorder %v120, 0.0
  %v123 = vmul.f32 %v119, 0.2
  %v124 = vmul.f32 %v120, 0.2
  %v125 = vsel %vm121, %v119, %v123
  %v126 = vsel %vm122, %v120, %v124
  %v127 = vsel %vm24, %v125, -9e+15
  %v128 = vsel %vm25, %v126, -9e+15
  %v129 = vsel %vm50, %v127, -inf
  %130 = vmax.xlane.f32.xlu0 %v129
  %v131 = vpop.xlane.xlu0 %130
  %v132 = vsel %vm50, %v128, -inf
  %133 = vmax.xlane.f32.xlu0 %v132
  %v134 = vpop.xlane.xlu0 %133
  %v135 = vsub.f32 %v127, %v131
  %v136 = vsub.f32 %v128, %v134
  %v137 = vmul.f32 %v135, 1.442695
  %v138 = vpow.pop %v137
  %v139 = vmul.f32 %v136, 1.442695
  %v140 = vpow.pop %v139
  %v141 = vsel %vm50, %v138, 0.0
  %142 = vadd.xlane.f32.xlu0 %v141
  %v143 = vpop.xlane.xlu0 %142
  %v144 = vsel %vm50, %v140, 0.0
  %145 = vadd.xlane.f32.xlu0 %v144
  %v146 = vpop.xlane.xlu0 %145
  %v147 = vrcp.pop %v143
  %v148 = vrcp.pop %v146
  %v149 = vmul.f32 %v138, %v147
  %v150 = vmul.f32 %v140, %v148
  %v151 = vpack.c.bf16 %v150, %v149
  %152 = vrot.lane.b32.xlu0 %v80, 120
  %v153 = vpop.permute.xlu0 %152
  %v156 = vsel %vm50, %v151, 0
  %158 = vmatpush.bf16.msra.mxu0 0
  %159 = vmatpush.bf16.msra.mxu0 0
  %160 = vmatpush.bf16.msra.mxu0 0
  %161 = vmatpush.bf16.msra.mxu0 0
  %162 = vmatpush.bf16.msra.mxu0 0
  %163 = vmatpush.bf16.msra.mxu0 0
  %164 = vmatpush.bf16.msra.mxu0 0
  %165 = vmatpush.bf16.msra.mxu0 %v153
  %166 = vmatmul.bf16.gmra.mxu0 %v156
  %v167 = vpop.f32.mrf.mxu0
  %v168 = vadd.f32 0.0, %v167
  %v169 = vpop.f32.mrf.mxu0
  %v170 = vadd.f32 0.0, %v169
  %171 = vdwg.mxu0
  %vm172 = vcmp.gt.f32.partialorder %v168, 0.0
  %vm173 = vcmp.gt.f32.partialorder %v170, 0.0
  %v174 = vmul.f32 %v168, 1.442695
  %v175 = vpow.pop %v174
  %v176 = vmul.f32 %v170, 1.442695
  %v177 = vpow.pop %v176
  %v178 = vsub.f32 %v175, 1.0
  %v179 = vsub.f32 %v177, 1.0
  %v180 = vsel %vm172, %v168, %v178
  %v181 = vsel %vm173, %v170, %v179
  %v182 = vld [vmem:[%s3 + $0x2] sm:$0x1]
  %183 = vset.pattern.permute.xlu0 2
  %184 = vperm.xlu0 %183, %v26
  %v185 = vpop.permute.xlu0 %184
  %187 = vset.pattern.permute.xlu0 2
  %188 = vperm.xlu0 %187, %v27
  %v189 = vpop.permute.xlu0 %188
  %v191 = vperm.slane %v182, 0
  %v192 = vadd.f32 %v185, %v191
  %v193 = vadd.f32 %v189, %v191
  %vm194 = vcmp.gt.f32.partialorder %v192, 0.0
  %vm195 = vcmp.gt.f32.partialorder %v193, 0.0
  %v196 = vmul.f32 %v192, 0.2
  %v197 = vmul.f32 %v193, 0.2
  %v198 = vsel %vm194, %v192, %v196
  %v199 = vsel %vm195, %v193, %v197
  %v200 = vsel %vm24, %v198, -9e+15
  %v201 = vsel %vm25, %v199, -9e+15
  %v202 = vsel %vm50, %v200, -inf
  %203 = vmax.xlane.f32.xlu0 %v202
  %v204 = vpop.xlane.xlu0 %203
  %v205 = vsel %vm50, %v201, -inf
  %206 = vmax.xlane.f32.xlu0 %v205
  %v207 = vpop.xlane.xlu0 %206
  %v208 = vsub.f32 %v200, %v204
  %v209 = vsub.f32 %v201, %v207
  %v210 = vmul.f32 %v208, 1.442695
  %v211 = vpow.pop %v210
  %v212 = vmul.f32 %v209, 1.442695
  %v213 = vpow.pop %v212
  %v214 = vsel %vm50, %v211, 0.0
  %215 = vadd.xlane.f32.xlu0 %v214
  %v216 = vpop.xlane.xlu0 %215
  %v217 = vsel %vm50, %v213, 0.0
  %218 = vadd.xlane.f32.xlu0 %v217
  %v219 = vpop.xlane.xlu0 %218
  %v220 = vrcp.pop %v216
  %v221 = vrcp.pop %v219
  %v222 = vmul.f32 %v211, %v220
  %v223 = vmul.f32 %v213, %v221
  %v224 = vpack.c.bf16 %v223, %v222
  %225 = vrot.lane.b32.xlu0 %v80, 112
  %v226 = vpop.permute.xlu0 %225
  %v229 = vsel %vm50, %v224, 0
  %231 = vmatpush.bf16.msra.mxu0 0
  %232 = vmatpush.bf16.msra.mxu0 0
  %233 = vmatpush.bf16.msra.mxu0 0
  %234 = vmatpush.bf16.msra.mxu0 0
  %235 = vmatpush.bf16.msra.mxu0 0
  %236 = vmatpush.bf16.msra.mxu0 0
  %237 = vmatpush.bf16.msra.mxu0 0
  %238 = vmatpush.bf16.msra.mxu0 %v226
  %239 = vmatmul.bf16.gmra.mxu0 %v229
  %v240 = vpop.f32.mrf.mxu0
  %v241 = vadd.f32 0.0, %v240
  %v242 = vpop.f32.mrf.mxu0
  %v243 = vadd.f32 0.0, %v242
  %244 = vdwg.mxu0
  %vm245 = vcmp.gt.f32.partialorder %v241, 0.0
  %vm246 = vcmp.gt.f32.partialorder %v243, 0.0
  %v247 = vmul.f32 %v241, 1.442695
  %v248 = vpow.pop %v247
  %v249 = vmul.f32 %v243, 1.442695
  %v250 = vpow.pop %v249
  %v251 = vsub.f32 %v248, 1.0
  %v252 = vsub.f32 %v250, 1.0
  %v253 = vsel %vm245, %v241, %v251
  %v254 = vsel %vm246, %v243, %v252
  %v255 = vld [vmem:[%s3 + $0x3] sm:$0x1]
  %256 = vset.pattern.permute.xlu0 3
  %257 = vperm.xlu0 %256, %v26
  %v258 = vpop.permute.xlu0 %257
  %260 = vset.pattern.permute.xlu0 3
  %261 = vperm.xlu0 %260, %v27
  %v262 = vpop.permute.xlu0 %261
  %v264 = vperm.slane %v255, 0
  %v265 = vadd.f32 %v258, %v264
  %v266 = vadd.f32 %v262, %v264
  %vm267 = vcmp.gt.f32.partialorder %v265, 0.0
  %vm268 = vcmp.gt.f32.partialorder %v266, 0.0
  %v269 = vmul.f32 %v265, 0.2
  %v270 = vmul.f32 %v266, 0.2
  %v271 = vsel %vm267, %v265, %v269
  %v272 = vsel %vm268, %v266, %v270
  %v273 = vsel %vm24, %v271, -9e+15
  %v274 = vsel %vm25, %v272, -9e+15
  %v275 = vsel %vm50, %v273, -inf
  %276 = vmax.xlane.f32.xlu0 %v275
  %v277 = vpop.xlane.xlu0 %276
  %v278 = vsel %vm50, %v274, -inf
  %279 = vmax.xlane.f32.xlu0 %v278
  %v280 = vpop.xlane.xlu0 %279
  %v281 = vsub.f32 %v273, %v277
  %v282 = vsub.f32 %v274, %v280
  %v283 = vmul.f32 %v281, 1.442695
  %v284 = vpow.pop %v283
  %v285 = vmul.f32 %v282, 1.442695
  %v286 = vpow.pop %v285
  %v287 = vsel %vm50, %v284, 0.0
  %288 = vadd.xlane.f32.xlu0 %v287
  %v289 = vpop.xlane.xlu0 %288
  %v290 = vsel %vm50, %v286, 0.0
  %291 = vadd.xlane.f32.xlu0 %v290
  %v292 = vpop.xlane.xlu0 %291
  %v293 = vrcp.pop %v289
  %v294 = vrcp.pop %v292
  %v295 = vmul.f32 %v284, %v293
  %v296 = vmul.f32 %v286, %v294
  %v297 = vpack.c.bf16 %v296, %v295
  %298 = vrot.lane.b32.xlu0 %v80, 104
  %v299 = vpop.permute.xlu0 %298
  %v302 = vsel %vm50, %v297, 0
  %304 = vmatpush.bf16.msra.mxu0 0
  %305 = vmatpush.bf16.msra.mxu0 0
  %306 = vmatpush.bf16.msra.mxu0 0
  %307 = vmatpush.bf16.msra.mxu0 0
  %308 = vmatpush.bf16.msra.mxu0 0
  %309 = vmatpush.bf16.msra.mxu0 0
  %310 = vmatpush.bf16.msra.mxu0 0
  %311 = vmatpush.bf16.msra.mxu0 %v299
  %312 = vmatmul.bf16.gmra.mxu0 %v302
  %v313 = vpop.f32.mrf.mxu0
  %v314 = vadd.f32 0.0, %v313
  %v315 = vpop.f32.mrf.mxu0
  %v316 = vadd.f32 0.0, %v315
  %317 = vdwg.mxu0
  %vm318 = vcmp.gt.f32.partialorder %v314, 0.0
  %vm319 = vcmp.gt.f32.partialorder %v316, 0.0
  %v320 = vmul.f32 %v314, 1.442695
  %v321 = vpow.pop %v320
  %v322 = vmul.f32 %v316, 1.442695
  %v323 = vpow.pop %v322
  %v324 = vsub.f32 %v321, 1.0
  %v325 = vsub.f32 %v323, 1.0
  %v326 = vsel %vm318, %v314, %v324
  %v327 = vsel %vm319, %v316, %v325
  %330 = vrot.lane.b32.xlu0 %v180, 8
  %v331 = vpop.permute.xlu0 %330
  %332 = vrot.lane.b32.xlu0 %v181, 8
  %v333 = vpop.permute.xlu0 %332
  %338 = vrot.lane.b32.xlu0 %v253, 16
  %v339 = vpop.permute.xlu0 %338
  %340 = vrot.lane.b32.xlu0 %v254, 16
  %v341 = vpop.permute.xlu0 %340
  %346 = vrot.lane.b32.xlu0 %v326, 24
  %v347 = vpop.permute.xlu0 %346
  %348 = vrot.lane.b32.xlu0 %v327, 24
  %v349 = vpop.permute.xlu0 %348
  %vm352 = vcmask 64512
  %v353 = vsel %vm352, %v107, %v331
  %v354 = vsel %vm352, %v108, %v333
  %v355 = vsel %vm50, %v353, %v339
  %v356 = vsel %vm50, %v354, %v341
  %vm357 = vcmask 195584
  %v358 = vsel %vm357, %v355, %v347
  %v359 = vsel %vm357, %v356, %v349
  %vm360 = vcmask 261120
  %v361 = vsel %vm360, %v358, 0.0
  %v362 = vsel %vm360, %v359, 0.0
  %363 = vst [vmem:[%s4] sm:$0xff] %v361
  %364 = vst [vmem:[%s4 + $0x8] sm:$0xff] %v362
  // Predicated region
  $region18: #{_lambda_.2} parent=0 // pred_check
    _
  $region19: #{_lambda_.2} parent=0 // pred_check_branch
    %366 = sbr.rel (0) target = $region21
  $region20: #{_lambda_.2} parent=0 // pred_region
    _
  $region21: #{_lambda_.2} parent=0 // pred_fallthru
    _
  // Predicated region
  $region22: #{_lambda_.2} parent=0 // pred_check
    _
  $region23: #{_lambda_.2} parent=0 // pred_check_branch
    %368 = sbr.rel (0) target = $region25
  $region24: #{_lambda_.2} parent=0 // pred_region
    _
  $region25: #{_lambda_.2} parent=0 // pred_fallthru
    _

</llo_original>
